<compile_context>
chip_gen: v5e
topology: v5e:2x2
jax: 0.10.0
libtpu: 0.0.40
codegen_flags: <defaults>
</compile_context>

<pallas_src>
import jax
import jax.numpy as jnp
from jax import lax
from jax.experimental import pallas as pl
from jax.experimental.pallas import tpu as pltpu

BN_EPS = 1e-5
LANES = 128


def _round_up(x, m):
    return (x + m - 1) // m * m


# -----------------------------------------------------------------------------
# Kernel A: conv-as-matmul + per-channel sum / sum-of-squares accumulation.
# -----------------------------------------------------------------------------
def conv_stats_kernel(p_ref, w_ref, y_ref, sum_ref, sq_ref):
    i = pl.program_id(0)

    # (row_tile, K) @ (K, Cout_p) on the MXU, f32 accumulate.
    y = jnp.dot(p_ref[...], w_ref[...], preferred_element_type=jnp.float32)
    y_ref[...] = y

    # Global per-channel statistics, accumulated across the row-tile grid
    # (sum/sq output blocks map to the same block every step -> resident accumulators).
    @pl.when(i == 0)
    def _():
        sum_ref[...] = jnp.zeros_like(sum_ref)
        sq_ref[...] = jnp.zeros_like(sq_ref)

    sum_ref[...] += jnp.sum(y, axis=0, keepdims=True)
    sq_ref[...] += jnp.sum(y * y, axis=0, keepdims=True)


# -----------------------------------------------------------------------------
# Kernel B: fused per-channel scale/shift (BatchNorm) + ReLU.
# -----------------------------------------------------------------------------
def bn_relu_kernel(y_ref, scale_ref, shift_ref, o_ref):
    o_ref[...] = jnp.maximum(
        y_ref[...] * scale_ref[...] + shift_ref[...], 0.0
    ).astype(o_ref.dtype)


# -----------------------------------------------------------------------------
# Wrapper
# -----------------------------------------------------------------------------
def conv3d_bn_relu(x, w, gamma, beta, *, stride, padding,
                   row_tile=128, operand_dtype=jnp.float32):
    """Conv3d (bias dropped; cancelled by BN) + training-mode BatchNorm3d + ReLU.

    x:     (N, Cin, D, H, W) float32
    w:     (Cout, Cin, kd, kh, kw) float32
    gamma, beta: (Cout,) float32
    Returns (N, Cout, Dout, Hout, Wout) float32.

    row_tile=128 is plenty for the small demo; for large N use 512-1024 rows and
    budget 2 * row_tile * (K + Cout_p) * 4 B (double-buffered tiles) against v7x's
    32 MiB scoped VMEM, raising vmem_limit_bytes if you exceed the default.
    """
    n, cin, d, h, wdim = x.shape
    cout, _, kd, kh, kw = w.shape
    sd, sh, sw = stride
    pd, ph, pw = padding

    dout = (d + 2 * pd - kd) // sd + 1
    hout = (h + 2 * ph - kh) // sh + 1
    wout = (wdim + 2 * pw - kw) // sw + 1

    # ---- im2col (wrapper-side layout plumbing) --------------------------------
    xp = jnp.pad(x, ((0, 0), (0, 0), (pd, pd), (ph, ph), (pw, pw)))
    slabs = []
    for a in range(kd):
        for b in range(kh):
            for c in range(kw):
                slabs.append(lax.slice(
                    xp,
                    (0, 0, a, b, c),
                    (n, cin,
                     a + sd * (dout - 1) + 1,
                     b + sh * (hout - 1) + 1,
                     c + sw * (wout - 1) + 1),
                    (1, 1, sd, sh, sw)))          # each (N, Cin, Dout, Hout, Wout)
    pat = jnp.stack(slabs, axis=0).reshape(kd, kh, kw, n, cin, dout, hout, wout)
    pat = pat.transpose(3, 5, 6, 7, 4, 0, 1, 2)    # (N, Do, Ho, Wo, Cin, kd, kh, kw)
    k_dim = cin * kd * kh * kw
    n_rows = n * dout * hout * wout
    patches = pat.reshape(n_rows, k_dim)

    # Weight as (K, Cout_p); same (Cin, kd, kh, kw) column order as the patches,
    # zero-padded to a lane-dense multiple of 128 output channels.
    cout_p = _round_up(cout, LANES)
    w_t = jnp.pad(w.reshape(cout, k_dim).T, ((0, 0), (0, cout_p - cout)))

    # Pad rows to a multiple of the tile. Zero patch rows give y == 0 (no bias),
    # so they do not perturb the (sum, sum-of-squares) statistics.
    n_rows_p = _round_up(n_rows, row_tile)
    patches = jnp.pad(patches, ((0, n_rows_p - n_rows), (0, 0)))
    num_tiles = n_rows_p // row_tile

    # Optional bf16 matmul operands (v6e/v7x MXU); accumulation and BN stay f32.
    patches = patches.astype(operand_dtype)
    w_t = w_t.astype(operand_dtype)

    # ---- pass 1: conv matmul + global per-channel statistics ------------------
    y_unnorm, ysum, ysq = pl.pallas_call(
        conv_stats_kernel,
        out_shape=(
            jax.ShapeDtypeStruct((n_rows_p, cout_p), jnp.float32),
            jax.ShapeDtypeStruct((1, cout_p), jnp.float32),
            jax.ShapeDtypeStruct((1, cout_p), jnp.float32),
        ),
        grid=(num_tiles,),
        in_specs=[
            pl.BlockSpec((row_tile, k_dim), lambda i: (i, 0)),
            pl.BlockSpec((k_dim, cout_p), lambda i: (0, 0)),   # weight stays resident
        ],
        out_specs=(
            pl.BlockSpec((row_tile, cout_p), lambda i: (i, 0)),
            pl.BlockSpec((1, cout_p), lambda i: (0, 0)),        # sum accumulator
            pl.BlockSpec((1, cout_p), lambda i: (0, 0)),        # sumsq accumulator
        ),
        compiler_params=pltpu.CompilerParams(
            dimension_semantics=("arbitrary",)),   # stats accumulate across tiles
    )(patches, w_t)

    # ---- fold BatchNorm into per-channel scale/shift (tiny, stays in XLA) -----
    mean = ysum / n_rows
    var = jnp.maximum(ysq / n_rows - mean * mean, 0.0)    # biased batch variance
    inv_std = lax.rsqrt(var + BN_EPS)
    gamma_p = jnp.pad(gamma.reshape(1, cout), ((0, 0), (0, cout_p - cout)))
    beta_p = jnp.pad(beta.reshape(1, cout), ((0, 0), (0, cout_p - cout)))
    scale = gamma_p * inv_std
    shift = beta_p - mean * scale

    # ---- pass 2: y * scale + shift, ReLU (row-parallel, lane-dense stores) ----
    out2d = pl.pallas_call(
        bn_relu_kernel,
        out_shape=jax.ShapeDtypeStruct((n_rows_p, cout_p), jnp.float32),
        grid=(num_tiles,),
        in_specs=[
            pl.BlockSpec((row_tile, cout_p), lambda i: (i, 0)),
            pl.BlockSpec((1, cout_p), lambda i: (0, 0)),
            pl.BlockSpec((1, cout_p), lambda i: (0, 0)),
        ],
        out_specs=pl.BlockSpec((row_tile, cout_p), lambda i: (i, 0)),
        compiler_params=pltpu.CompilerParams(
            dimension_semantics=("parallel",)),    # rows shard across TCs on v7x
    )(y_unnorm, scale, shift)

    out = out2d[:n_rows, :cout].reshape(n, dout, hout, wout, cout)
    return out.transpose(0, 4, 1, 2, 3)


# -----------------------------------------------------------------------------
# Pure-JAX reference mirroring the PyTorch module (training-mode BN, with bias).
# -----------------------------------------------------------------------------
def reference_forward(x, w, bias, gamma, beta, *, stride, padding):
    y = lax.conv_general_dilated(
        x, w, window_strides=stride,
        padding=[(padding[0], padding[0]),
                 (padding[1], padding[1]),
                 (padding[2], padding[2])],
        dimension_numbers=("NCDHW", "OIDHW", "NCDHW"))
    y = y + bias[None, :, None, None, None]
    mean = jnp.mean(y, axis=(0, 2, 3, 4), keepdims=True)
    var = jnp.mean((y - mean) ** 2, axis=(0, 2, 3, 4), keepdims=True)
    y = (y - mean) / jnp.sqrt(var + BN_EPS)
    y = y * gamma[None, :, None, None, None] + beta[None, :, None, None, None]
    return jnp.maximum(y, 0.0)


if __name__ == "__main__":
    # Small shapes consistent with a VoxelNet-style Conv3d block.
    n, cin, d, h, wdim = 2, 4, 4, 16, 16
    cout, k = 8, 3
    stride = (2, 1, 1)
    padding = (1, 1, 1)

    key = jax.random.PRNGKey(0)
    kx, kw_, kb, kg, kbe = jax.random.split(key, 5)

    x = jax.random.normal(kx, (n, cin, d, h, wdim), dtype=jnp.float32)
    w = jax.random.normal(kw_, (cout, cin, k, k, k), dtype=jnp.float32) / jnp.sqrt(cin * k ** 3)
    bias = 0.1 * jax.random.normal(kb, (cout,), dtype=jnp.float32)   # cancelled by BN
    gamma = 1.0 + 0.1 * jax.random.normal(kg, (cout,), dtype=jnp.float32)
    beta = 0.1 * jax.random.normal(kbe, (cout,), dtype=jnp.float32)

    ref = reference_forward(x, w, bias, gamma, beta, stride=stride, padding=padding)

    # f32 path: exact PyTorch-semantics check (bias drop only changes rounding).
    out = conv3d_bn_relu(x, w, gamma, beta, stride=stride, padding=padding)
    out = jax.block_until_ready(out)
    assert out.shape == ref.shape, (out.shape, ref.shape)
    max_err = float(jnp.max(jnp.abs(out - ref)))
    assert jnp.allclose(out, ref, atol=1e-3, rtol=1e-3), max_err

    # bf16 matmul operands (v6e/v7x MXU path); BN/ReLU epilogue stays f32.
    out_bf16 = conv3d_bn_relu(x, w, gamma, beta, stride=stride, padding=padding,
                              operand_dtype=jnp.bfloat16)
    out_bf16 = jax.block_until_ready(out_bf16)
    assert out_bf16.shape == ref.shape
    assert bool(jnp.all(jnp.isfinite(out_bf16)))
    assert jnp.allclose(out_bf16, ref, atol=1e-1, rtol=1e-1)

    print("KERNEL_OK")
</pallas_src>

<mosaic_0001>
module attributes {stable_mosaic.version = 11 : i64} {
  func.func @conv_stats_kernel(%arg0: i32, %arg1: memref<128x108xf32, #tpu.memory_space<vmem>>, %arg2: memref<108x128xf32, #tpu.memory_space<vmem>>, %arg3: memref<128x128xf32, #tpu.memory_space<vmem>>, %arg4: memref<1x128xf32, #tpu.memory_space<vmem>>, %arg5: memref<1x128xf32, #tpu.memory_space<vmem>>) attributes {dimension_semantics = [#tpu.dimension_semantics<arbitrary>], iteration_bounds = array<i64: 8>, scalar_prefetch = 0 : i64, scratch_operands = 0 : i64, tpu.core_type = #tpu.core_type<tc>, window_params = [{transform_indices = @transform_0, window_bounds = array<i64: 128, 108>}, {pipeline_mode = #tpu.pipeline_mode<synchronous>, transform_indices = @transform_1, window_bounds = array<i64: 108, 128>}, {transform_indices = @transform_2, window_bounds = array<i64: 128, 128>}, {pipeline_mode = #tpu.pipeline_mode<synchronous>, transform_indices = @transform_3, window_bounds = array<i64: 1, 128>}, {pipeline_mode = #tpu.pipeline_mode<synchronous>, transform_indices = @transform_4, window_bounds = array<i64: 1, 128>}]} {
    %c0 = arith.constant 0 : index
    %c0_0 = arith.constant 0 : index
    %0 = vector.load %arg1[%c0, %c0_0] : memref<128x108xf32, #tpu.memory_space<vmem>>, vector<128x108xf32>
    %c0_1 = arith.constant 0 : index
    %c0_2 = arith.constant 0 : index
    %1 = vector.load %arg2[%c0_1, %c0_2] : memref<108x128xf32, #tpu.memory_space<vmem>>, vector<108x128xf32>
    %cst = arith.constant dense<0.000000e+00> : vector<128x128xf32>
    %2 = tpu.matmul %0, %1, %cst {dimension_numbers = #tpu.dot_dimension_numbers<[1], [0], [0], [1], [0, 0, 1, 1], [], []>} : vector<128x108xf32>, vector<108x128xf32>, vector<128x128xf32> -> vector<128x128xf32>
    %c0_3 = arith.constant 0 : index
    %c0_4 = arith.constant 0 : index
    %3 = vector.load %arg3[%c0_3, %c0_4] : memref<128x128xf32, #tpu.memory_space<vmem>>, vector<128x128xf32>
    tpu.vector_store %arg3[%c0_3, %c0_4], %2 {strides = array<i32>} : memref<128x128xf32, #tpu.memory_space<vmem>>, vector<128x128xf32>,
    %c0_i32 = arith.constant 0 : i32
    %4 = arith.cmpi eq, %arg0, %c0_i32 : i32
    %5 = arith.extui %4 : i1 to i32
    %c0_i32_5 = arith.constant 0 : i32
    %6 = arith.cmpi ne, %5, %c0_i32_5 : i32
    scf.if %6 {
      %cst_16 = arith.constant 0.000000e+00 : f32
      %18 = vector.broadcast %cst_16 : f32 to vector<1x128xf32>
      %c0_17 = arith.constant 0 : index
      %c0_18 = arith.constant 0 : index
      %19 = vector.load %arg4[%c0_17, %c0_18] : memref<1x128xf32, #tpu.memory_space<vmem>>, vector<1x128xf32>
      tpu.vector_store %arg4[%c0_17, %c0_18], %18 {strides = array<i32>} : memref<1x128xf32, #tpu.memory_space<vmem>>, vector<1x128xf32>,
      %cst_19 = arith.constant 0.000000e+00 : f32
      %20 = vector.broadcast %cst_19 : f32 to vector<1x128xf32>
      %c0_20 = arith.constant 0 : index
      %c0_21 = arith.constant 0 : index
      %21 = vector.load %arg5[%c0_20, %c0_21] : memref<1x128xf32, #tpu.memory_space<vmem>>, vector<1x128xf32>
      tpu.vector_store %arg5[%c0_20, %c0_21], %20 {strides = array<i32>} : memref<1x128xf32, #tpu.memory_space<vmem>>, vector<1x128xf32>,
    } else {
    }
    %c0_6 = arith.constant 0 : index
    %c0_7 = arith.constant 0 : index
    %7 = vector.load %arg4[%c0_6, %c0_7] : memref<1x128xf32, #tpu.memory_space<vmem>>, vector<1x128xf32>
    %cst_8 = arith.constant dense<0.000000e+00> : vector<128xf32>
    %8 = vector.multi_reduction <add>, %2, %cst_8 [0] : vector<128x128xf32> to vector<128xf32>
    %9 = vector.shape_cast %8 : vector<128xf32> to vector<1x128xf32>
    %10 = arith.addf %7, %9 : vector<1x128xf32>
    %c0_9 = arith.constant 0 : index
    %c0_10 = arith.constant 0 : index
    %11 = vector.load %arg4[%c0_9, %c0_10] : memref<1x128xf32, #tpu.memory_space<vmem>>, vector<1x128xf32>
    tpu.vector_store %arg4[%c0_9, %c0_10], %10 {strides = array<i32>} : memref<1x128xf32, #tpu.memory_space<vmem>>, vector<1x128xf32>,
    %c0_11 = arith.constant 0 : index
    %c0_12 = arith.constant 0 : index
    %12 = vector.load %arg5[%c0_11, %c0_12] : memref<1x128xf32, #tpu.memory_space<vmem>>, vector<1x128xf32>
    %13 = arith.mulf %2, %2 : vector<128x128xf32>
    %cst_13 = arith.constant dense<0.000000e+00> : vector<128xf32>
    %14 = vector.multi_reduction <add>, %13, %cst_13 [0] : vector<128x128xf32> to vector<128xf32>
    %15 = vector.shape_cast %14 : vector<128xf32> to vector<1x128xf32>
    %16 = arith.addf %12, %15 : vector<1x128xf32>
    %c0_14 = arith.constant 0 : index
    %c0_15 = arith.constant 0 : index
    %17 = vector.load %arg5[%c0_14, %c0_15] : memref<1x128xf32, #tpu.memory_space<vmem>>, vector<1x128xf32>
    tpu.vector_store %arg5[%c0_14, %c0_15], %16 {strides = array<i32>} : memref<1x128xf32, #tpu.memory_space<vmem>>, vector<1x128xf32>,
    return
  }
  func.func @transform_0(%arg0: i32) -> (i32, i32) {
    %c0_i32 = arith.constant 0 : i32
    %c0_i32_0 = arith.constant 0 : i32
    return %arg0, %c0_i32 : i32, i32
  }
  func.func @transform_1(%arg0: i32) -> (i32, i32) {
    %c0_i32 = arith.constant 0 : i32
    %c0_i32_0 = arith.constant 0 : i32
    %c0_i32_1 = arith.constant 0 : i32
    return %c0_i32, %c0_i32_0 : i32, i32
  }
  func.func @transform_2(%arg0: i32) -> (i32, i32) {
    %c0_i32 = arith.constant 0 : i32
    %c0_i32_0 = arith.constant 0 : i32
    return %arg0, %c0_i32 : i32, i32
  }
  func.func @transform_3(%arg0: i32) -> (i32, i32) {
    %c0_i32 = arith.constant 0 : i32
    %c0_i32_0 = arith.constant 0 : i32
    %c0_i32_1 = arith.constant 0 : i32
    return %c0_i32, %c0_i32_0 : i32, i32
  }
  func.func @transform_4(%arg0: i32) -> (i32, i32) {
    %c0_i32 = arith.constant 0 : i32
    %c0_i32_0 = arith.constant 0 : i32
    %c0_i32_1 = arith.constant 0 : i32
    return %c0_i32, %c0_i32_0 : i32, i32
  }
}

</mosaic_0001>

<llo_original>
// kernel: tpu_custom_call.1
$region0: #{tpu_custom_call.1}
  #allocation0 [shape = 'u32[]', space=smem, size = 0x4, offset = 0x4, fixed_abs, tag = 'smem constant byte address 0x4 - core index']
  #allocation1 [shape = 'u32[72,128]{1,0:T(1,128)}', space=vmem, size = 0x9000, scoped, tag = 'internal scratch']
  %s0 = inlined_call_operand.vmem [shape: f32[1024,108], index: 0, kind: input, shape index: {}]
  %s1 = inlined_call_operand.vmem [shape: f32[108,128], index: 1, kind: input, shape index: {}]
  %s2 = inlined_call_operand.hbm [shape: f32[1024,128], index: 2, kind: output, shape index: {0}]
  %s3 = inlined_call_operand.hbm [shape: f32[1,128], index: 3, kind: output, shape index: {1}]
  %s4 = inlined_call_operand.hbm [shape: f32[1,128], index: 4, kind: output, shape index: {2}]
  %5 = xla_tuple %s2, %s3, %s4
  %s6 = sld [smem:[#allocation0]]
  $region61: #{tpu_custom_call.1} parent=0
    _
  %s8 = ssub.s32 1, %s6
  %s9 = scalar_select 0, %s8, %s6
  $region1: #{tpu_custom_call.1} parent=0
    #allocation2 [shape = 'u8[131072]{0}', space=vmem, size = 0x20000, scoped, tag = 'output window, operand 0']
    #allocation3 [shape = 's32[2]{0}', space=sflag, size = 0x8, scoped, tag = 'scoped memory for tpu_custom_call.1']
    #allocation4 [shape = 'u8[512]{0}', space=vmem, size = 0x400, scoped, tag = 'output window, operand 1, single buffered']
    #allocation5 [shape = 's32[1]{0}', space=sflag, size = 0x4, scoped, tag = 'scoped memory for tpu_custom_call.1']
    #allocation6 [shape = 'u8[512]{0}', space=vmem, size = 0x400, scoped, tag = 'output window, operand 2, single buffered']
    %10 = vsyncpa [#allocation3], 0
    %s11 = scalar_lea.sflag [#allocation3], 1
    %12 = vsyncpa %s11, 0
    %13 = vsyncpa [#allocation5], 0
    loop: start=0, step=1, limit=10
    $region2: #{tpu_custom_call.1} parent=1 // loop_pre_header
      _
    $region3: #{tpu_custom_call.1} parent=1 // loop_header
      %s15 = sphi 0, %s19
      %p16 = scmp.ge.s32.totalorder %s15, 10
      %s25 = sphi 0, %s27
      %s28 = sphi 0, %s25
      %s29 = sphi 0, %s28
      %s45 = sphi 0, %s29
      %s49 = sphi 0, %s49
      %s51 = sphi 0, %s49
      %s52 = sphi 0, %s51
      %s66 = sphi 0, %s52
      %s72 = sphi 0, %s74
      %s75 = sphi 0, %s72
      %s76 = sphi 0, %s75
      %s92 = sphi 0, %s76
      %s96 = sphi 0, %s96
      %s98 = sphi 0, %s96
      %s99 = sphi 0, %s98
      %s113 = sphi 0, %s99
      %s117 = sphi 0, %s117
      %s119 = sphi 0, %s117
      %s120 = sphi 0, %s119
      %s134 = sphi 0, %s120
    $region4: #{tpu_custom_call.1} parent=1 // loop_header_branch
      %18 = sbr.rel (%p16) target = $region8
    $region5: #{tpu_custom_call.1} parent=1 // loop_body
      %s20 = ssub.s32 %s15, 1
      %s21 = ssub.s32 %s15, 2
      %s22 = sadd.s32 %s15, 1
      %s23 = ssub.s32 %s15, %s22
      %p24 = scmp.eq.s32.totalorder %s23, 0
      %s26 = sadd.s32 %s25, 1
      %s27 = scalar_select %p24, %s25, %s26
      %p30 = pneg %p24
      %p31 = scmp.eq.s32.totalorder %s15, 7
      %p32 = por %p30, %p31
      %p33 = scmp.ne.s32.totalorder %s25, %s28
      %p34 = scmp.eq.s32.totalorder %s15, 0
      %p35 = por %p33, %p34
      %p36 = scmp.ne.s32.totalorder %s25, %s28
      %p37 = scmp.eq.s32.totalorder %s20, 7
      %p38 = por %p36, %p37
      %p39 = scmp.ne.s32.totalorder %s28, %s29
      %p40 = scmp.eq.s32.totalorder %s20, 0
      %p41 = por %p39, %p40
      %p42 = scmp.ne.s32.totalorder %s28, %s29
      %p43 = scmp.eq.s32.totalorder %s21, 7
      %p44 = por %p42, %p43
      %p46 = scmp.ne.s32.totalorder %s29, %s45
      %p47 = scmp.eq.s32.totalorder %s21, 0
      %p48 = por %p46, %p47
      %s50 = sadd.s32 %s49, 1
      %p53 = scmp.eq.s32.totalorder %s15, 7
      %p54 = scmp.ne.s32.totalorder %s49, %s51
      %p55 = scmp.eq.s32.totalorder %s15, 0
      %p56 = por %p54, %p55
      %p57 = scmp.ne.s32.totalorder %s49, %s51
      %p58 = scmp.eq.s32.totalorder %s20, 7
      %p59 = por %p57, %p58
      %p60 = scmp.ne.s32.totalorder %s51, %s52
      %p61 = scmp.eq.s32.totalorder %s20, 0
      %p62 = por %p60, %p61
      %p63 = scmp.ne.s32.totalorder %s51, %s52
      %p64 = scmp.eq.s32.totalorder %s21, 7
      %p65 = por %p63, %p64
      %p67 = scmp.ne.s32.totalorder %s52, %s66
      %p68 = scmp.eq.s32.totalorder %s21, 0
      %p69 = por %p67, %p68
      %s70 = ssub.s32 %s15, %s22
      %p71 = scmp.eq.s32.totalorder %s70, 0
      %s73 = sadd.s32 %s72, 1
      %s74 = scalar_select %p71, %s72, %s73
      %p77 = pneg %p71
      %p78 = scmp.eq.s32.totalorder %s15, 7
      %p79 = por %p77, %p78
      %p80 = scmp.ne.s32.totalorder %s72, %s75
      %p81 = scmp.eq.s32.totalorder %s15, 0
      %p82 = por %p80, %p81
      %p83 = scmp.ne.s32.totalorder %s72, %s75
      %p84 = scmp.eq.s32.totalorder %s20, 7
      %p85 = por %p83, %p84
      %p86 = scmp.ne.s32.totalorder %s75, %s76
      %p87 = scmp.eq.s32.totalorder %s20, 0
      %p88 = por %p86, %p87
      %p89 = scmp.ne.s32.totalorder %s75, %s76
      %p90 = scmp.eq.s32.totalorder %s21, 7
      %p91 = por %p89, %p90
      %p93 = scmp.ne.s32.totalorder %s76, %s92
      %p94 = scmp.eq.s32.totalorder %s21, 0
      %p95 = por %p93, %p94
      %s97 = sadd.s32 %s96, 1
      %p100 = scmp.eq.s32.totalorder %s15, 7
      %p101 = scmp.ne.s32.totalorder %s96, %s98
      %p102 = scmp.eq.s32.totalorder %s15, 0
      %p103 = por %p101, %p102
      %p104 = scmp.ne.s32.totalorder %s96, %s98
      %p105 = scmp.eq.s32.totalorder %s20, 7
      %p106 = por %p104, %p105
      %p107 = scmp.ne.s32.totalorder %s98, %s99
      %p108 = scmp.eq.s32.totalorder %s20, 0
      %p109 = por %p107, %p108
      %p110 = scmp.ne.s32.totalorder %s98, %s99
      %p111 = scmp.eq.s32.totalorder %s21, 7
      %p112 = por %p110, %p111
      %p114 = scmp.ne.s32.totalorder %s99, %s113
      %p115 = scmp.eq.s32.totalorder %s21, 0
      %p116 = por %p114, %p115
      %s118 = sadd.s32 %s117, 1
      %p121 = scmp.eq.s32.totalorder %s15, 7
      %p122 = scmp.ne.s32.totalorder %s117, %s119
      %p123 = scmp.eq.s32.totalorder %s15, 0
      %p124 = por %p122, %p123
      %p125 = scmp.ne.s32.totalorder %s117, %s119
      %p126 = scmp.eq.s32.totalorder %s20, 7
      %p127 = por %p125, %p126
      %p128 = scmp.ne.s32.totalorder %s119, %s120
      %p129 = scmp.eq.s32.totalorder %s20, 0
      %p130 = por %p128, %p129
      %p131 = scmp.ne.s32.totalorder %s119, %s120
      %p132 = scmp.eq.s32.totalorder %s21, 7
      %p133 = por %p131, %p132
      %p135 = scmp.ne.s32.totalorder %s120, %s134
      %p136 = scmp.eq.s32.totalorder %s21, 0
      %p137 = por %p135, %p136
      %p138 = scmp.le.s32.totalorder 1, %s15
      %p139 = scmp.lt.s32.totalorder %s15, 9
      %p140 = pnand %p138, %p139
      %p141 = pneg %p140
      // Predicated region
      $region9: #{tpu_custom_call.1} parent=5 // pred_check
        _
      $region10: #{tpu_custom_call.1} parent=5 // pred_check_branch
        %143 = sbr.rel (%p140) target = $region12
      $region11: #{tpu_custom_call.1} parent=5 // pred_region
        %s144 = ssub.s32 %s15, 1
        // Predicated region
        $region13: #{tpu_custom_call.1} parent=11 // pred_check
          %p145 = pneg %p62
        $region14: #{tpu_custom_call.1} parent=11 // pred_check_branch
          %147 = sbr.rel (%p145) target = $region16
        $region15: #{tpu_custom_call.1} parent=11 // pred_region
          _
        $region16: #{tpu_custom_call.1} parent=11 // pred_fallthru
          _
      $region12: #{tpu_custom_call.1} parent=5 // pred_fallthru
        _
      %p148 = scmp.lt.s32.totalorder %s15, 8
      // Predicated region
      $region17: #{tpu_custom_call.1} parent=5 // pred_check
        %p149 = pneg %p148
      $region18: #{tpu_custom_call.1} parent=5 // pred_check_branch
        %151 = sbr.rel (%p149) target = $region20
      $region19: #{tpu_custom_call.1} parent=5 // pred_region
        // Predicated region
        $region21: #{tpu_custom_call.1} parent=19 // pred_check
          %p152 = pneg %p35
        $region22: #{tpu_custom_call.1} parent=19 // pred_check_branch
          %154 = sbr.rel (%p152) target = $region24
        $region23: #{tpu_custom_call.1} parent=19 // pred_region
          %s155 = smul.u32 16, %s15
          %p156 = scmp.lt.s32.totalorder %s155, 127
          %s157 = scalar_select %p156, %s155, 127
          %s158 = smul.addr %s157, 8
          %s159 = scalar_lea.vmem %s0, %s158
          %s160 = smul.u32 16, %s15
        $region24: #{tpu_custom_call.1} parent=19 // pred_fallthru
          _
      $region20: #{tpu_custom_call.1} parent=5 // pred_fallthru
        _
      %p161 = scmp.le.s32.totalorder 1, %s15
      %p162 = scmp.lt.s32.totalorder %s15, 9
      %p163 = pnand %p161, %p162
      %p164 = pneg %p163
      // Predicated region
      $region25: #{tpu_custom_call.1} parent=5 // pred_check
        _
      $region26: #{tpu_custom_call.1} parent=5 // pred_check_branch
        %166 = sbr.rel (%p163) target = $region28
      $region27: #{tpu_custom_call.1} parent=5 // pred_region
        %s167 = ssub.s32 %s15, 1
        %s168 = smul.u32 16, %s20
        %p169 = scmp.lt.s32.totalorder %s168, 127
        %s170 = scalar_select %p169, %s168, 127
        %s171 = smul.addr %s170, 8
        %s172 = scalar_lea.vmem %s0, %s171
        %p173 = pneg %p41
        %p174 = pneg %p38
        %p175 = pneg %p62
        %p176 = pneg %p59
        %p177 = pneg %p88
        %p178 = pneg %p85
        %s179 = sand.u32 %s75, 1
        %s180 = scalar_lea.sflag [#allocation3], %s179
        %s181 = sand.u32 %s75, 1
        %s182 = smul.addr %s181, 128
        %s183 = scalar_lea.vmem [#allocation2], %s182
        %p184 = pneg %p109
        %p185 = pneg %p106
        %p186 = pneg %p130
        %p187 = pneg %p127
        %s188 = smul.u32 16, %s20
        %p189 = scmp.lt.s32.totalorder %s188, 127
        %s190 = scalar_select %p189, %s188, 127
        %s191 = smul.addr %s190, 8
        %s192 = scalar_lea.vmem %s0, %s191
        %s193 = smul.u32 16, %s20
        %s194 = smul.u32 16, %s20
        %v195 = vld [vmem:[%s192] sm:$0xff]
        %v196 = vld [vmem:[%s192 + $0x8] sm:$0xff]
        %v197 = vld [vmem:[%s192 + $0x10] sm:$0xff]
        %v198 = vld [vmem:[%s192 + $0x18] sm:$0xff]
        %v199 = vld [vmem:[%s192 + $0x20] sm:$0xff]
        %v200 = vld [vmem:[%s192 + $0x28] sm:$0xff]
        %v201 = vld [vmem:[%s192 + $0x30] sm:$0xff]
        %v202 = vld [vmem:[%s192 + $0x38] sm:$0xff]
        %v203 = vld [vmem:[%s192 + $0x40] sm:$0xff]
        %v204 = vld [vmem:[%s192 + $0x48] sm:$0xff]
        %v205 = vld [vmem:[%s192 + $0x50] sm:$0xff]
        %v206 = vld [vmem:[%s192 + $0x58] sm:$0xff]
        %v207 = vld [vmem:[%s192 + $0x60] sm:$0xff]
        %v208 = vld [vmem:[%s192 + $0x68] sm:$0xff]
        %v209 = vld [vmem:[%s192 + $0x70] sm:$0xff]
        %v210 = vld [vmem:[%s192 + $0x78] sm:$0xff]
        %v211 = vld [vmem:[%s1] sm:$0xff]
        %v212 = vld [vmem:[%s1 + $0x8] sm:$0xff]
        %v213 = vld [vmem:[%s1 + $0x10] sm:$0xff]
        %v214 = vld [vmem:[%s1 + $0x18] sm:$0xff]
        %v215 = vld [vmem:[%s1 + $0x20] sm:$0xff]
        %v216 = vld [vmem:[%s1 + $0x28] sm:$0xff]
        %v217 = vld [vmem:[%s1 + $0x30] sm:$0xff]
        %v218 = vld [vmem:[%s1 + $0x38] sm:$0xff]
        %v219 = vld [vmem:[%s1 + $0x40] sm:$0xff]
        %v220 = vld [vmem:[%s1 + $0x48] sm:$0xff]
        %v221 = vld [vmem:[%s1 + $0x50] sm:$0xff]
        %v222 = vld [vmem:[%s1 + $0x58] sm:$0xff]
        %v223 = vld [vmem:[%s1 + $0x60] sm:$0xff]
        %v224 = vld [vmem:[%s1 + $0x68] sm:$0xf]
        %vm225 = vcmask 883712
        %v227 = vsel %vm225, %v195, 0
        %v230 = vsel %vm225, %v196, 0
        %v233 = vsel %vm225, %v197, 0
        %v236 = vsel %vm225, %v198, 0
        %v239 = vsel %vm225, %v199, 0
        %v242 = vsel %vm225, %v200, 0
        %v245 = vsel %vm225, %v201, 0
        %v248 = vsel %vm225, %v202, 0
        %v251 = vsel %vm225, %v203, 0
        %v254 = vsel %vm225, %v204, 0
        %v257 = vsel %vm225, %v205, 0
        %v260 = vsel %vm225, %v206, 0
        %v263 = vsel %vm225, %v207, 0
        %v266 = vsel %vm225, %v208, 0
        %v269 = vsel %vm225, %v209, 0
        %v272 = vsel %vm225, %v210, 0
        %vm274 = vcmask 1043456
        %v276 = vsel %vm274, %v224, 0
        %278 = vmatpush.msra.mxu0 0.0
        %279 = vmatpush.msra.mxu0 0.0
        %280 = vmatpush.msra.mxu0 %v276
        %281 = vmatpush.msra.mxu0 %v223
        %282 = vmatpush.msra.mxu0 %v222
        %283 = vmatpush.msra.mxu0 %v221
        %284 = vmatpush.msra.mxu0 %v220
        %285 = vmatpush.msra.mxu0 %v219
        %286 = vmatpush.msra.mxu0 %v218
        %287 = vmatpush.msra.mxu0 %v217
        %288 = vmatpush.msra.mxu0 %v216
        %289 = vmatpush.msra.mxu0 %v215
        %290 = vmatpush.msra.mxu0 %v214
        %291 = vmatpush.msra.mxu0 %v213
        %292 = vmatpush.msra.mxu0 %v212
        %293 = vmatpush.msra.mxu0 %v211
        %294 = vmatmul.f32.gmra.mxu0 %v227
        %v295 = vpop.f32.mrf.mxu0
        %v296 = vadd.f32 0.0, %v295
        %297 = vmatmul.f32.gmra.mxu0 %v230
        %v298 = vpop.f32.mrf.mxu0
        %v299 = vadd.f32 0.0, %v298
        %300 = vmatmul.f32.gmra.mxu0 %v233
        %v301 = vpop.f32.mrf.mxu0
        %v302 = vadd.f32 0.0, %v301
        %303 = vmatmul.f32.gmra.mxu0 %v236
        %v304 = vpop.f32.mrf.mxu0
        %v305 = vadd.f32 0.0, %v304
        %306 = vmatmul.f32.gmra.mxu0 %v239
        %v307 = vpop.f32.mrf.mxu0
        %v308 = vadd.f32 0.0, %v307
        %309 = vmatmul.f32.gmra.mxu0 %v242
        %v310 = vpop.f32.mrf.mxu0
        %v311 = vadd.f32 0.0, %v310
        %312 = vmatmul.f32.gmra.mxu0 %v245
        %v313 = vpop.f32.mrf.mxu0
        %v314 = vadd.f32 0.0, %v313
        %315 = vmatmul.f32.gmra.mxu0 %v248
        %v316 = vpop.f32.mrf.mxu0
        %v317 = vadd.f32 0.0, %v316
        %318 = vmatmul.f32.gmra.mxu0 %v251
        %v319 = vpop.f32.mrf.mxu0
        %v320 = vadd.f32 0.0, %v319
        %321 = vmatmul.f32.gmra.mxu0 %v254
        %v322 = vpop.f32.mrf.mxu0
        %v323 = vadd.f32 0.0, %v322
        %324 = vmatmul.f32.gmra.mxu0 %v257
        %v325 = vpop.f32.mrf.mxu0
        %v326 = vadd.f32 0.0, %v325
        %327 = vmatmul.f32.gmra.mxu0 %v260
        %v328 = vpop.f32.mrf.mxu0
        %v329 = vadd.f32 0.0, %v328
        %330 = vmatmul.f32.gmra.mxu0 %v263
        %v331 = vpop.f32.mrf.mxu0
        %v332 = vadd.f32 0.0, %v331
        %333 = vmatmul.f32.gmra.mxu0 %v266
        %v334 = vpop.f32.mrf.mxu0
        %v335 = vadd.f32 0.0, %v334
        %336 = vmatmul.f32.gmra.mxu0 %v269
        %v337 = vpop.f32.mrf.mxu0
        %v338 = vadd.f32 0.0, %v337
        %339 = vmatmul.f32.gmra.mxu0 %v272
        %v340 = vpop.f32.mrf.mxu0
        %v341 = vadd.f32 0.0, %v340
        %342 = vdwg.mxu0
        %343 = vst [vmem:[%s183] sm:$0xff] %v296
        %344 = vst [vmem:[%s183 + $0x8] sm:$0xff] %v299
        %345 = vst [vmem:[%s183 + $0x10] sm:$0xff] %v302
        %346 = vst [vmem:[%s183 + $0x18] sm:$0xff] %v305
        %347 = vst [vmem:[%s183 + $0x20] sm:$0xff] %v308
        %348 = vst [vmem:[%s183 + $0x28] sm:$0xff] %v311
        %349 = vst [vmem:[%s183 + $0x30] sm:$0xff] %v314
        %350 = vst [vmem:[%s183 + $0x38] sm:$0xff] %v317
        %351 = vst [vmem:[%s183 + $0x40] sm:$0xff] %v320
        %352 = vst [vmem:[%s183 + $0x48] sm:$0xff] %v323
        %353 = vst [vmem:[%s183 + $0x50] sm:$0xff] %v326
        %354 = vst [vmem:[%s183 + $0x58] sm:$0xff] %v329
        %355 = vst [vmem:[%s183 + $0x60] sm:$0xff] %v332
        %356 = vst [vmem:[%s183 + $0x68] sm:$0xff] %v335
        %357 = vst [vmem:[%s183 + $0x70] sm:$0xff] %v338
        %358 = vst [vmem:[%s183 + $0x78] sm:$0xff] %v341
        %p359 = scmp.eq.s32.totalorder %s20, 0
        // Predicated region
        $region29: #{tpu_custom_call.1} parent=27 // pred_check
          %p360 = pneg %p359
        $region30: #{tpu_custom_call.1} parent=27 // pred_check_branch
          %362 = sbr.rel (%p360) target = $region32
        $region31: #{tpu_custom_call.1} parent=27 // pred_region
          %363 = vst [vmem:[#allocation4] sm:$0x1] 0.0
          %364 = vst [vmem:[#allocation6] sm:$0x1] 0.0
        $region32: #{tpu_custom_call.1} parent=27 // pred_fallthru
          _
        %v365 = vld [vmem:[#allocation4] sm:$0x1]
        %v366 = vadd.f32 %v296, %v299
        %v367 = vadd.f32 %v366, %v302
        %v368 = vadd.f32 %v367, %v305
        %v369 = vadd.f32 %v368, %v308
        %v370 = vadd.f32 %v369, %v311
        %v371 = vadd.f32 %v370, %v314
        %v372 = vadd.f32 %v371, %v317
        %v373 = vadd.f32 %v372, %v320
        %v374 = vadd.f32 %v373, %v323
        %v375 = vadd.f32 %v374, %v326
        %v376 = vadd.f32 %v375, %v329
        %v377 = vadd.f32 %v376, %v332
        %v378 = vadd.f32 %v377, %v335
        %v379 = vadd.f32 %v378, %v338
        %v380 = vadd.f32 %v379, %v341
        %v381 = vrot.slane %v380, 4
        %v382 = vadd.f32 %v380, %v381
        %v383 = vrot.slane %v382, 2
        %v384 = vadd.f32 %v382, %v383
        %v385 = vrot.slane %v384, 1
        %v386 = vadd.f32 %v384, %v385
        %v387 = vadd.f32 %v365, %v386
        %388 = vst [vmem:[#allocation4] sm:$0x1] %v387
        %v389 = vld [vmem:[#allocation6] sm:$0x1]
        %v390 = vmul.f32 %v296, %v296
        %v391 = vmul.f32 %v299, %v299
        %v392 = vmul.f32 %v302, %v302
        %v393 = vmul.f32 %v305, %v305
        %v394 = vmul.f32 %v308, %v308
        %v395 = vmul.f32 %v311, %v311
        %v396 = vmul.f32 %v314, %v314
        %v397 = vmul.f32 %v317, %v317
        %v398 = vmul.f32 %v320, %v320
        %v399 = vmul.f32 %v323, %v323
        %v400 = vmul.f32 %v326, %v326
        %v401 = vmul.f32 %v329, %v329
        %v402 = vmul.f32 %v332, %v332
        %v403 = vmul.f32 %v335, %v335
        %v404 = vmul.f32 %v338, %v338
        %v405 = vmul.f32 %v341, %v341
        %v406 = vadd.f32 %v390, %v391
        %v407 = vadd.f32 %v406, %v392
        %v408 = vadd.f32 %v407, %v393
        %v409 = vadd.f32 %v408, %v394
        %v410 = vadd.f32 %v409, %v395
        %v411 = vadd.f32 %v410, %v396
        %v412 = vadd.f32 %v411, %v397
        %v413 = vadd.f32 %v412, %v398
        %v414 = vadd.f32 %v413, %v399
        %v415 = vadd.f32 %v414, %v400
        %v416 = vadd.f32 %v415, %v401
        %v417 = vadd.f32 %v416, %v402
        %v418 = vadd.f32 %v417, %v403
        %v419 = vadd.f32 %v418, %v404
        %v420 = vadd.f32 %v419, %v405
        %v421 = vrot.slane %v420, 4
        %v422 = vadd.f32 %v420, %v421
        %v423 = vrot.slane %v422, 2
        %v424 = vadd.f32 %v422, %v423
        %v425 = vrot.slane %v424, 1
        %v426 = vadd.f32 %v424, %v425
        %v427 = vadd.f32 %v389, %v426
        %428 = vst [vmem:[#allocation6] sm:$0x1] %v427
        %s429 = sand.u32 %s75, 1
        %s430 = scalar_lea.sflag [#allocation3], %s429
        %s431 = sand.u32 %s75, 1
        %s432 = smul.addr %s431, 128
        %s433 = scalar_lea.vmem [#allocation2], %s432
        // Predicated region
        $region33: #{tpu_custom_call.1} parent=27 // pred_check
          %p434 = pneg %p85
        $region34: #{tpu_custom_call.1} parent=27 // pred_check_branch
          %436 = sbr.rel (%p434) target = $region36
        $region35: #{tpu_custom_call.1} parent=27 // pred_region
          %s437 = smul.u32 16, %s20
          %439 = vsyncadd %s430, 0
          %s440 = smul.addr %s437, 8
          %s441 = scalar_lea.hbm %s2, %s440
          %s442 = sshll.u32 %s433, 4
          %s443 = int_to_ptr.vmem [resolvable:$true] %s442
          %s444 = sshll.u32 %s441, 4
          %s445 = int_to_ptr.hbm [resolvable:$true] %s444
          %450 = dma.vmem_to_hbm [thread:$0]  %s443, 2048, %s445, %s430, 128, 128, 8
        $region36: #{tpu_custom_call.1} parent=27 // pred_fallthru
          _
        // Predicated region
        $region37: #{tpu_custom_call.1} parent=27 // pred_check
          %p451 = pneg %p106
        $region38: #{tpu_custom_call.1} parent=27 // pred_check_branch
          %453 = sbr.rel (%p451) target = $region40
        $region39: #{tpu_custom_call.1} parent=27 // pred_region
          %455 = vsyncadd [#allocation5], 0
          %s457 = sshll.u32 [#allocation4], 4
          %s458 = int_to_ptr.vmem [resolvable:$true] %s457
          %s459 = sshll.u32 %s3, 4
          %s460 = int_to_ptr.hbm [resolvable:$true] %s459
          %462 = dma.vmem_to_hbm [thread:$0]  %s458, 16, %s460, [#allocation5]
        $region40: #{tpu_custom_call.1} parent=27 // pred_fallthru
          _
        // Predicated region
        $region41: #{tpu_custom_call.1} parent=27 // pred_check
          %p463 = pneg %p127
        $region42: #{tpu_custom_call.1} parent=27 // pred_check_branch
          %465 = sbr.rel (%p463) target = $region44
        $region43: #{tpu_custom_call.1} parent=27 // pred_region
          %467 = vsyncadd [#allocation5], 0
          %s469 = sshll.u32 [#allocation6], 4
          %s470 = int_to_ptr.vmem [resolvable:$true] %s469
          %s471 = sshll.u32 %s4, 4
          %s472 = int_to_ptr.hbm [resolvable:$true] %s471
          %474 = dma.vmem_to_hbm [thread:$0]  %s470, 16, %s472, [#allocation5]
        $region44: #{tpu_custom_call.1} parent=27 // pred_fallthru
          _
        // Predicated region
        $region45: #{tpu_custom_call.1} parent=27 // pred_check
          %p475 = pneg %p106
        $region46: #{tpu_custom_call.1} parent=27 // pred_check_branch
          %477 = sbr.rel (%p475) target = $region48
        $region47: #{tpu_custom_call.1} parent=27 // pred_region
          %479 = dma.done [#allocation5], 16
        $region48: #{tpu_custom_call.1} parent=27 // pred_fallthru
          _
        // Predicated region
        $region49: #{tpu_custom_call.1} parent=27 // pred_check
          %p480 = pneg %p127
        $region50: #{tpu_custom_call.1} parent=27 // pred_check_branch
          %482 = sbr.rel (%p480) target = $region52
        $region51: #{tpu_custom_call.1} parent=27 // pred_region
          %484 = dma.done [#allocation5], 16
        $region52: #{tpu_custom_call.1} parent=27 // pred_fallthru
          _
      $region28: #{tpu_custom_call.1} parent=5 // pred_fallthru
        _
      %p485 = scmp.le.s32.totalorder 2, %s15
      // Predicated region
      $region53: #{tpu_custom_call.1} parent=5 // pred_check
        %p486 = pneg %p485
      $region54: #{tpu_custom_call.1} parent=5 // pred_check_branch
        %488 = sbr.rel (%p486) target = $region56
      $region55: #{tpu_custom_call.1} parent=5 // pred_region
        %s489 = ssub.s32 %s15, 2
        // Predicated region
        $region57: #{tpu_custom_call.1} parent=55 // pred_check
          %p490 = pneg %p91
        $region58: #{tpu_custom_call.1} parent=55 // pred_check_branch
          %492 = sbr.rel (%p490) target = $region60
        $region59: #{tpu_custom_call.1} parent=55 // pred_region
          %s493 = sand.u32 %s76, 1
          %s494 = scalar_lea.sflag [#allocation3], %s493
          %s495 = sand.u32 %s76, 1
          %s496 = smul.addr %s495, 128
          %s497 = scalar_lea.vmem [#allocation2], %s496
          %499 = dma.done %s494, 2048
        $region60: #{tpu_custom_call.1} parent=55 // pred_fallthru
          _
      $region56: #{tpu_custom_call.1} parent=5 // pred_fallthru
        _
    $region6: #{tpu_custom_call.1} parent=1 // loop_footer
      %s19 = sadd.s32 1, %s15
    $region7: #{tpu_custom_call.1} parent=1 // loop_footer_branch
      %14 = sbr.rel target = $region3
    $region8: #{tpu_custom_call.1} parent=1 // loop_exit
      _
    %500 = vsyncpa [#allocation3], 1
    %s501 = scalar_lea.sflag [#allocation3], 1
    %502 = vsyncpa %s501, 1
    %503 = vsyncpa [#allocation5], 1

</llo_original>
